<compile_context>
chip_gen: v6e
topology: v6e:2x2x1
jax: 0.10.0
libtpu: 0.0.40
codegen_flags: <defaults>
</compile_context>

<pallas_src>
import numpy as np
import jax
import jax.numpy as jnp
from jax.experimental import pallas as pl
from jax.experimental.pallas import tpu as pltpu


LANES = 128
N_ROWS = 40  # (40, 128) f32 slab = 20 KiB, one DMA

# --- slab row layout (8-row-tile aligned groups) ---------------------------
ROW_JW0  = 0    # 2 rows: row r = W_ji1[r, 0] broadcast across all lanes
ROW_JW1  = 2    # 2 rows: row r = W_ji1[r, 1] broadcast
ROW_JB   = 4    # 2 rows: row r = b_ji1[r] broadcast
ROW_BE1  = 6    # 1 row : lane m = b_e1[m] (m < 4), rest 0
ROW_A0   = 8    # 4 rows: row n, lane i = W_ji2[i, n, 0] (i < 7), rest 0
ROW_A1   = 12   # 4 rows: row n, lane i = W_ji2[i, n, 1]
ROW_E1   = 16   # 8 rows (one full tile): row c, lane m = W_e1[m, c] (m < 4)
ROW_B2S  = 24   # 4 rows: row n = sum_i b_ji2[i, n] broadcast across all lanes
ROW_WE2  = 28   # 2 rows: row p, lane m = W_e2[p, m] (m < 4), rest 0
ROW_BE2  = 30   # 2 rows: row p = b_e2[p] broadcast across all lanes
ROW_WJO0 = 32   # lane i = W_jo[i, 0, 0] (i < 7), rest 0
ROW_WJO1 = 33   # lane i = W_jo[i, 0, 1]
ROW_BJO  = 34   # lane i = b_jo[i, 0]


def prepare_params(p):
    """One-time repack of the PyTorch-style parameter dict into the slab."""
    W_ji1 = np.asarray(p["W_ji1"], np.float32)      # (2, 2)
    b_ji1 = np.asarray(p["b_ji1"], np.float32)      # (2,)
    W_ji2 = np.asarray(p["W_ji2"], np.float32)      # (7, 4, 2)
    b_ji2 = np.asarray(p["b_ji2"], np.float32)      # (7, 4)
    W_e1  = np.asarray(p["W_e1"],  np.float32)      # (4, 8)
    b_e1  = np.asarray(p["b_e1"],  np.float32)      # (4,)
    W_e2  = np.asarray(p["W_e2"],  np.float32)      # (2, 4)
    b_e2  = np.asarray(p["b_e2"],  np.float32)      # (2,)
    W_jo  = np.asarray(p["W_jo"],  np.float32)      # (7, 1, 2)
    b_jo  = np.asarray(p["b_jo"],  np.float32)      # (7, 1)

    slab = np.zeros((N_ROWS, LANES), np.float32)
    for r in range(2):
        slab[ROW_JW0 + r, :] = W_ji1[r, 0]
        slab[ROW_JW1 + r, :] = W_ji1[r, 1]
        slab[ROW_JB + r, :]  = b_ji1[r]
    slab[ROW_BE1, :4] = b_e1
    for n in range(4):
        slab[ROW_A0 + n, :7] = W_ji2[:, n, 0]
        slab[ROW_A1 + n, :7] = W_ji2[:, n, 1]
        slab[ROW_B2S + n, :] = b_ji2[:, n].sum()
    for c in range(8):
        slab[ROW_E1 + c, :4] = W_e1[:, c]
    for pp in range(2):
        slab[ROW_WE2 + pp, :4] = W_e2[pp]
        slab[ROW_BE2 + pp, :]  = b_e2[pp]
    slab[ROW_WJO0, :7] = W_jo[:, 0, 0]
    slab[ROW_WJO1, :7] = W_jo[:, 0, 1]
    slab[ROW_BJO, :7]  = b_jo[:, 0]
    return jnp.asarray(slab)


# ---------------------------------------------------------------------------
# Kernel: whole forward pass, VPU/XLU/EUP only (no MXU), one packed slab.
# ---------------------------------------------------------------------------
def sympolicy_kernel(x_ref, p_ref, out_ref):
    obs_blk = x_ref[0:4, :]      # (4,128) row c = obs[c] broadcast across lanes
    j2      = x_ref[4:6, :]      # (2,128) both rows = j (lanes 0..6, rest 0)
    jd2     = x_ref[6:8, :]      # (2,128) both rows = jd
    j_row   = x_ref[4:5, :]      # (1,128)
    jd_row  = x_ref[6:7, :]      # (1,128)

    # --- fc_ji_1 + tanh, all 7 joints on lanes, both output units on 2 sublanes;
    #     scalars pre-broadcast in the slab; single tanh push. ----------------
    h = jnp.tanh(j2 * p_ref[ROW_JW0:ROW_JW0 + 2, :]
                 + jd2 * p_ref[ROW_JW1:ROW_JW1 + 2, :]
                 + p_ref[ROW_JB:ROW_JB + 2, :])                      # (2,128)

    # --- sum_i fc_ji_2_list[i](h_i): fused (4,128) product + ONE lane reduce.
    #     Padded lanes i>=7 contribute 0 because W_ji2 slab rows are 0 there.
    prod = (h[0:1, :] * p_ref[ROW_A0:ROW_A0 + 4, :]
            + h[1:2, :] * p_ref[ROW_A1:ROW_A1 + 4, :])               # (4,128)
    jin_red = jnp.sum(prod, axis=-1, keepdims=True)                  # (4,1)
    # Pre-summed biases broadcast in slab; result is j_in[n] in every lane of row n.
    jin_blk = jnp.tanh(jin_red + p_ref[ROW_B2S:ROW_B2S + 4, :])      # (4,128)

    # --- fc_e_1 on concat([obs, j_in]) + tanh: one sublane-stacked (8,128)
    #     multiply + ONE sublane reduce (replaces the serial MAC chain). ------
    u_blk = jnp.concatenate([obs_blk, jin_blk], axis=0)              # (8,128)
    emb = jnp.tanh(jnp.sum(u_blk * p_ref[ROW_E1:ROW_E1 + 8, :],
                           axis=0, keepdims=True)
                   + p_ref[ROW_BE1:ROW_BE1 + 1, :])                  # (1,128), lanes 0..3

    # --- fc_e_2 + tanh: one fused lane reduce, both outputs in one tanh. -----
    e_red = jnp.sum(emb * p_ref[ROW_WE2:ROW_WE2 + 2, :],
                    axis=-1, keepdims=True)                          # (2,1)
    e_blk = jnp.tanh(e_red + p_ref[ROW_BE2:ROW_BE2 + 2, :])          # (2,128): row p = e_p

    # --- fc_jo_list[i](emb + jcat[:, :, i]) for all 7 joints, lane-parallel.
    #     Padded lanes come out exactly 0 (W_jo/b_jo slab rows are 0 there). --
    out7 = ((e_blk[0:1, :] + j_row) * p_ref[ROW_WJO0:ROW_WJO0 + 1, :]
            + (e_blk[1:2, :] + jd_row) * p_ref[ROW_WJO1:ROW_WJO1 + 1, :]
            + p_ref[ROW_BJO:ROW_BJO + 1, :])                         # (1,128)

    # Single unmasked full-vreg store; consumer uses row 0, lanes 0..6.
    out_ref[...] = jnp.broadcast_to(out7, out_ref.shape)


# ---------------------------------------------------------------------------
# Wrapper: XLA-side input packing + one pallas_call.
# ---------------------------------------------------------------------------
def _pack_x(x):
    obs = x[:, :4]
    j = x[:, 4:11]
    jd = x[:, 11:18]
    jrow = jnp.zeros((1, LANES), jnp.float32).at[:, :7].set(j)
    jdrow = jnp.zeros((1, LANES), jnp.float32).at[:, :7].set(jd)
    xb = jnp.zeros((8, LANES), jnp.float32)
    xb = xb.at[0:4, :].set(jnp.broadcast_to(obs.reshape(4, 1), (4, LANES)))
    xb = xb.at[4:6, :].set(jnp.broadcast_to(jrow, (2, LANES)))
    xb = xb.at[6:8, :].set(jnp.broadcast_to(jdrow, (2, LANES)))
    return xb


@jax.jit
def sympolicy_forward(x, packed):
    xb = _pack_x(x.astype(jnp.float32))
    vmem = pl.BlockSpec(memory_space=pltpu.MemorySpace.VMEM)
    out = pl.pallas_call(
        sympolicy_kernel,
        out_shape=jax.ShapeDtypeStruct((8, LANES), jnp.float32),
        in_specs=[vmem, vmem],
        out_specs=vmem,
        cost_estimate=pl.CostEstimate(
            flops=6_000, transcendentals=1_024,
            bytes_accessed=(8 + N_ROWS + 8) * LANES * 4),
    )(xb, packed)
    # Consumers that accept the padded (8,128) row could skip this slice.
    return out[0:1, :7]


# ---------------------------------------------------------------------------
# Pure-JAX reference mirroring the PyTorch forward loop exactly (float32).
# ---------------------------------------------------------------------------
def sympolicy_reference(x, p):
    obs = x[:, :4]
    j = x[:, 4:11]
    jd = x[:, 11:]
    jcat = jnp.stack([j, jd], axis=1)              # (1, 2, 7)
    j_in = jnp.zeros((1, 4), jnp.float32)
    for i in range(7):
        h = jnp.tanh(jcat[:, :, i] @ p["W_ji1"].T + p["b_ji1"])
        j_in = j_in + h @ p["W_ji2"][i].T + p["b_ji2"][i]
    j_in = jnp.tanh(j_in)
    emb = jnp.tanh(jnp.concatenate([obs, j_in], axis=1) @ p["W_e1"].T + p["b_e1"])
    emb = jnp.tanh(emb @ p["W_e2"].T + p["b_e2"])
    outs = []
    for i in range(7):
        outs.append((emb + jcat[:, :, i]) @ p["W_jo"][i].T + p["b_jo"][i])
    return jnp.concatenate(outs, axis=1)


def init_params(key):
    ks = jax.random.split(key, 10)
    scale = 0.3
    return {
        "W_ji1": scale * jax.random.normal(ks[0], (2, 2), jnp.float32),
        "b_ji1": scale * jax.random.normal(ks[1], (2,), jnp.float32),
        "W_ji2": scale * jax.random.normal(ks[2], (7, 4, 2), jnp.float32),
        "b_ji2": scale * jax.random.normal(ks[3], (7, 4), jnp.float32),
        "W_e1":  scale * jax.random.normal(ks[4], (4, 8), jnp.float32),
        "b_e1":  scale * jax.random.normal(ks[5], (4,), jnp.float32),
        "W_e2":  scale * jax.random.normal(ks[6], (2, 4), jnp.float32),
        "b_e2":  scale * jax.random.normal(ks[7], (2,), jnp.float32),
        "W_jo":  scale * jax.random.normal(ks[8], (7, 1, 2), jnp.float32),
        "b_jo":  scale * jax.random.normal(ks[9], (7, 1), jnp.float32),
    }


if __name__ == "__main__":
    key = jax.random.PRNGKey(0)
    k_x, k_p = jax.random.split(key)
    # x = [obs(4), joint angles(7), joint velocities(7)] -> (1, 18); module is batch-1 only.
    x = jax.random.normal(k_x, (1, 18), jnp.float32)
    params = init_params(k_p)

    packed = prepare_params(params)        # one-time repack, outside the hot path
    out = sympolicy_forward(x, packed)
    out = jax.block_until_ready(out)

    ref = sympolicy_reference(x, params)
    np.testing.assert_allclose(np.asarray(out), np.asarray(ref),
                               rtol=1e-3, atol=1e-3)
    assert out.shape == (1, 7) and out.dtype == jnp.float32
    print("KERNEL_OK")
</pallas_src>

<mosaic_0001>
module attributes {stable_mosaic.version = 11 : i64} {
  func.func @sympolicy_kernel(%arg0: memref<8x128xf32, #tpu.memory_space<vmem>>, %arg1: memref<40x128xf32, #tpu.memory_space<vmem>>, %arg2: memref<8x128xf32, #tpu.memory_space<vmem>>) attributes {dimension_semantics = [], scalar_prefetch = 0 : i64, scratch_operands = 0 : i64, tpu.core_type = #tpu.core_type<tc>} {
    %c0 = arith.constant 0 : index
    %c0_0 = arith.constant 0 : index
    %0 = vector.load %arg0[%c0, %c0_0] : memref<8x128xf32, #tpu.memory_space<vmem>>, vector<4x128xf32>
    %c4 = arith.constant 4 : index
    %c0_1 = arith.constant 0 : index
    %1 = vector.load %arg0[%c4, %c0_1] : memref<8x128xf32, #tpu.memory_space<vmem>>, vector<2x128xf32>
    %c6 = arith.constant 6 : index
    %c0_2 = arith.constant 0 : index
    %2 = vector.load %arg0[%c6, %c0_2] : memref<8x128xf32, #tpu.memory_space<vmem>>, vector<2x128xf32>
    %c4_3 = arith.constant 4 : index
    %c0_4 = arith.constant 0 : index
    %3 = vector.load %arg0[%c4_3, %c0_4] : memref<8x128xf32, #tpu.memory_space<vmem>>, vector<1x128xf32>
    %c6_5 = arith.constant 6 : index
    %c0_6 = arith.constant 0 : index
    %4 = vector.load %arg0[%c6_5, %c0_6] : memref<8x128xf32, #tpu.memory_space<vmem>>, vector<1x128xf32>
    %c0_7 = arith.constant 0 : index
    %c0_8 = arith.constant 0 : index
    %5 = vector.load %arg1[%c0_7, %c0_8] : memref<40x128xf32, #tpu.memory_space<vmem>>, vector<2x128xf32>
    %6 = arith.mulf %1, %5 : vector<2x128xf32>
    %c2 = arith.constant 2 : index
    %c0_9 = arith.constant 0 : index
    %7 = vector.load %arg1[%c2, %c0_9] : memref<40x128xf32, #tpu.memory_space<vmem>>, vector<2x128xf32>
    %8 = arith.mulf %2, %7 : vector<2x128xf32>
    %9 = arith.addf %6, %8 : vector<2x128xf32>
    %c4_10 = arith.constant 4 : index
    %c0_11 = arith.constant 0 : index
    %10 = vector.load %arg1[%c4_10, %c0_11] : memref<40x128xf32, #tpu.memory_space<vmem>>, vector<2x128xf32>
    %11 = arith.addf %9, %10 : vector<2x128xf32>
    %12 = math.tanh %11 : vector<2x128xf32>
    %13 = vector.extract_strided_slice %12 {offsets = [0, 0], sizes = [1, 128], strides = [1, 1]} : vector<2x128xf32> to vector<1x128xf32>
    %c8 = arith.constant 8 : index
    %c0_12 = arith.constant 0 : index
    %14 = vector.load %arg1[%c8, %c0_12] : memref<40x128xf32, #tpu.memory_space<vmem>>, vector<4x128xf32>
    %15 = vector.broadcast %13 : vector<1x128xf32> to vector<4x128xf32>
    %16 = arith.mulf %15, %14 : vector<4x128xf32>
    %17 = vector.extract_strided_slice %12 {offsets = [1, 0], sizes = [1, 128], strides = [1, 1]} : vector<2x128xf32> to vector<1x128xf32>
    %c12 = arith.constant 12 : index
    %c0_13 = arith.constant 0 : index
    %18 = vector.load %arg1[%c12, %c0_13] : memref<40x128xf32, #tpu.memory_space<vmem>>, vector<4x128xf32>
    %19 = vector.broadcast %17 : vector<1x128xf32> to vector<4x128xf32>
    %20 = arith.mulf %19, %18 : vector<4x128xf32>
    %21 = arith.addf %16, %20 : vector<4x128xf32>
    %cst = arith.constant dense<0.000000e+00> : vector<4xf32>
    %22 = vector.multi_reduction <add>, %21, %cst [1] : vector<4x128xf32> to vector<4xf32>
    %23 = vector.shape_cast %22 : vector<4xf32> to vector<4x1xf32>
    %c24 = arith.constant 24 : index
    %c0_14 = arith.constant 0 : index
    %24 = vector.load %arg1[%c24, %c0_14] : memref<40x128xf32, #tpu.memory_space<vmem>>, vector<4x128xf32>
    %25 = vector.broadcast %23 : vector<4x1xf32> to vector<4x128xf32>
    %26 = arith.addf %25, %24 : vector<4x128xf32>
    %27 = math.tanh %26 : vector<4x128xf32>
    %28 = tpu.concatenate %0, %27 in 0 : vector<4x128xf32>, vector<4x128xf32> -> vector<8x128xf32>
    %c16 = arith.constant 16 : index
    %c0_15 = arith.constant 0 : index
    %29 = vector.load %arg1[%c16, %c0_15] : memref<40x128xf32, #tpu.memory_space<vmem>>, vector<8x128xf32>
    %30 = arith.mulf %28, %29 : vector<8x128xf32>
    %cst_16 = arith.constant dense<0.000000e+00> : vector<128xf32>
    %31 = vector.multi_reduction <add>, %30, %cst_16 [0] : vector<8x128xf32> to vector<128xf32>
    %32 = vector.shape_cast %31 : vector<128xf32> to vector<1x128xf32>
    %c6_17 = arith.constant 6 : index
    %c0_18 = arith.constant 0 : index
    %33 = vector.load %arg1[%c6_17, %c0_18] : memref<40x128xf32, #tpu.memory_space<vmem>>, vector<1x128xf32>
    %34 = arith.addf %32, %33 : vector<1x128xf32>
    %35 = math.tanh %34 : vector<1x128xf32>
    %c28 = arith.constant 28 : index
    %c0_19 = arith.constant 0 : index
    %36 = vector.load %arg1[%c28, %c0_19] : memref<40x128xf32, #tpu.memory_space<vmem>>, vector<2x128xf32>
    %37 = vector.broadcast %35 : vector<1x128xf32> to vector<2x128xf32>
    %38 = arith.mulf %37, %36 : vector<2x128xf32>
    %cst_20 = arith.constant dense<0.000000e+00> : vector<2xf32>
    %39 = vector.multi_reduction <add>, %38, %cst_20 [1] : vector<2x128xf32> to vector<2xf32>
    %40 = vector.shape_cast %39 : vector<2xf32> to vector<2x1xf32>
    %c30 = arith.constant 30 : index
    %c0_21 = arith.constant 0 : index
    %41 = vector.load %arg1[%c30, %c0_21] : memref<40x128xf32, #tpu.memory_space<vmem>>, vector<2x128xf32>
    %42 = vector.broadcast %40 : vector<2x1xf32> to vector<2x128xf32>
    %43 = arith.addf %42, %41 : vector<2x128xf32>
    %44 = math.tanh %43 : vector<2x128xf32>
    %45 = vector.extract_strided_slice %44 {offsets = [0, 0], sizes = [1, 128], strides = [1, 1]} : vector<2x128xf32> to vector<1x128xf32>
    %46 = arith.addf %45, %3 : vector<1x128xf32>
    %c32 = arith.constant 32 : index
    %c0_22 = arith.constant 0 : index
    %47 = vector.load %arg1[%c32, %c0_22] : memref<40x128xf32, #tpu.memory_space<vmem>>, vector<1x128xf32>
    %48 = arith.mulf %46, %47 : vector<1x128xf32>
    %49 = vector.extract_strided_slice %44 {offsets = [1, 0], sizes = [1, 128], strides = [1, 1]} : vector<2x128xf32> to vector<1x128xf32>
    %50 = arith.addf %49, %4 : vector<1x128xf32>
    %c33 = arith.constant 33 : index
    %c0_23 = arith.constant 0 : index
    %51 = vector.load %arg1[%c33, %c0_23] : memref<40x128xf32, #tpu.memory_space<vmem>>, vector<1x128xf32>
    %52 = arith.mulf %50, %51 : vector<1x128xf32>
    %53 = arith.addf %48, %52 : vector<1x128xf32>
    %c34 = arith.constant 34 : index
    %c0_24 = arith.constant 0 : index
    %54 = vector.load %arg1[%c34, %c0_24] : memref<40x128xf32, #tpu.memory_space<vmem>>, vector<1x128xf32>
    %55 = arith.addf %53, %54 : vector<1x128xf32>
    %56 = vector.shape_cast %55 : vector<1x128xf32> to vector<1x128xf32>
    %57 = vector.broadcast %56 : vector<1x128xf32> to vector<8x128xf32>
    %c0_25 = arith.constant 0 : index
    %c0_26 = arith.constant 0 : index
    %58 = vector.load %arg2[%c0_25, %c0_26] : memref<8x128xf32, #tpu.memory_space<vmem>>, vector<8x128xf32>
    tpu.vector_store %arg2[%c0_25, %c0_26], %57 {strides = array<i32>} : memref<8x128xf32, #tpu.memory_space<vmem>>, vector<8x128xf32>,
    return
  }
}

</mosaic_0001>

<llo_original>
// kernel: sympolicy_forward.1
$region0: #{sympolicy_forward.1}
  #allocation0 [shape = 'u32[]', space=smem, size = 0x4, offset = 0x4, fixed_abs, tag = 'smem constant byte address 0x4 - core index']
  #allocation1 [shape = 'u32[144,128]{1,0:T(1,128)}', space=vmem, size = 0x12000, scoped, tag = 'internal scratch']
  %s0 = inlined_call_operand.vmem [shape: f32[8,128], index: 0, kind: input, shape index: {}]
  %s1 = inlined_call_operand.vmem [shape: f32[40,128], index: 1, kind: input, shape index: {}]
  %s2 = inlined_call_operand.vmem [shape: f32[8,128], index: 2, kind: output, shape index: {}]
  %s3 = sld [smem:[#allocation0]]
  $region18: #{sympolicy_forward.1} parent=0
    _
  %s5 = ssub.s32 1, %s3
  %s6 = scalar_select 0, %s5, %s3
  // Predicated region
  $region2: #{sympolicy_forward.1} parent=0 // pred_check
    _
  $region3: #{sympolicy_forward.1} parent=0 // pred_check_branch
    %8 = sbr.rel (0) target = $region5
  $region4: #{sympolicy_forward.1} parent=0 // pred_region
    _
  $region5: #{sympolicy_forward.1} parent=0 // pred_fallthru
    _
  // Predicated region
  $region6: #{sympolicy_forward.1} parent=0 // pred_check
    _
  $region7: #{sympolicy_forward.1} parent=0 // pred_check_branch
    %10 = sbr.rel (0) target = $region9
  $region8: #{sympolicy_forward.1} parent=0 // pred_region
    _
  $region9: #{sympolicy_forward.1} parent=0 // pred_fallthru
    _
  %v11 = vld [vmem:[%s0] sm:$0xf]
  %v12 = vld [vmem:[%s0 + $0x4] sm:$0x3]
  %v13 = vld [vmem:[%s0 + $0x6] sm:$0x3]
  %v14 = vld [vmem:[%s0 + $0x4] sm:$0x1]
  %v15 = vld [vmem:[%s0 + $0x6] sm:$0x1]
  %v16 = vld [vmem:[%s1] sm:$0x3]
  %v17 = vmul.f32 %v12, %v16
  %v18 = vld [vmem:[%s1 + $0x2] sm:$0x3]
  %v19 = vmul.f32 %v13, %v18
  %v20 = vadd.f32 %v17, %v19
  %v21 = vld [vmem:[%s1 + $0x4] sm:$0x3]
  %v22 = vadd.f32 %v20, %v21
  %v23 = vtanh.pop %v22
  %v24 = vld [vmem:[%s1 + $0x8] sm:$0xf]
  %v25 = vlaneseq
  %v26 = vshrl.u32 %v25, 7
  %v27 = vsub.s32 0, %v26
  %v28 = vrot.slane %v23, %v27
  %v29 = vmul.f32 %v28, %v24
  %v30 = vld [vmem:[%s1 + $0xc] sm:$0xf]
  %v31 = vlaneseq
  %v32 = vshrl.u32 %v31, 7
  %v33 = vsub.s32 1, %v32
  %v34 = vrot.slane %v23, %v33
  %v35 = vmul.f32 %v34, %v30
  %v36 = vadd.f32 %v29, %v35
  %vm37 = vcmask 1043456
  %v38 = vsel %vm37, %v36, 0.0
  %39 = vadd.xlane.f32.xlu0 %v38
  %v40 = vpop.xlane.xlu0 %39
  %v41 = vld [vmem:[%s1 + $0x18] sm:$0xf]
  %v42 = vadd.f32 %v40, %v41
  %v43 = vtanh.pop %v42
  %v45 = vrot.slane %v43, 4
  %v47 = vsel %vm37, %v11, %v45
  %v48 = vld [vmem:[%s1 + $0x10] sm:$0xff]
  %v49 = vmul.f32 %v47, %v48
  %v50 = vrot.slane %v49, 4
  %v51 = vadd.f32 %v49, %v50
  %v52 = vrot.slane %v51, 2
  %v53 = vadd.f32 %v51, %v52
  %v54 = vrot.slane %v53, 1
  %v55 = vadd.f32 %v53, %v54
  %v56 = vld [vmem:[%s1 + $0x6] sm:$0x1]
  %v57 = vadd.f32 %v55, %v56
  %v58 = vtanh.pop %v57
  %v59 = vld [vmem:[%s1 + $0x1c] sm:$0x3]
  %v60 = vlaneseq
  %v61 = vshrl.u32 %v60, 7
  %v62 = vsub.s32 0, %v61
  %v63 = vrot.slane %v58, %v62
  %v64 = vmul.f32 %v63, %v59
  %vm65 = vcmask 1041408
  %v66 = vsel %vm65, %v64, 0.0
  %67 = vadd.xlane.f32.xlu0 %v66
  %v68 = vpop.xlane.xlu0 %67
  %v69 = vld [vmem:[%s1 + $0x1e] sm:$0x3]
  %v70 = vadd.f32 %v68, %v69
  %v71 = vtanh.pop %v70
  %v72 = vadd.f32 %v71, %v14
  %v73 = vld [vmem:[%s1 + $0x20] sm:$0x1]
  %v74 = vmul.f32 %v72, %v73
  %v76 = vrot.slane %v15, 7
  %v78 = vadd.f32 %v71, %v76
  %v79 = vld [vmem:[%s1 + $0x21] sm:$0x1]
  %v81 = vrot.slane %v79, 7
  %v83 = vmul.f32 %v78, %v81
  %v85 = vrot.slane %v83, 1
  %v87 = vadd.f32 %v74, %v85
  %v88 = vld [vmem:[%s1 + $0x22] sm:$0x1]
  %v89 = vadd.f32 %v87, %v88
  %v90 = vlaneseq
  %v91 = vshrl.u32 %v90, 7
  %v92 = vsub.s32 0, %v91
  %v93 = vrot.slane %v89, %v92
  %94 = vst [vmem:[%s2] sm:$0xff] %v93
  // Predicated region
  $region10: #{sympolicy_forward.1} parent=0 // pred_check
    _
  $region11: #{sympolicy_forward.1} parent=0 // pred_check_branch
    %96 = sbr.rel (0) target = $region13
  $region12: #{sympolicy_forward.1} parent=0 // pred_region
    _
  $region13: #{sympolicy_forward.1} parent=0 // pred_fallthru
    _
  // Predicated region
  $region14: #{sympolicy_forward.1} parent=0 // pred_check
    _
  $region15: #{sympolicy_forward.1} parent=0 // pred_check_branch
    %98 = sbr.rel (0) target = $region17
  $region16: #{sympolicy_forward.1} parent=0 // pred_region
    _
  $region17: #{sympolicy_forward.1} parent=0 // pred_fallthru
    _

</llo_original>
